<compile_context>
chip_gen: v5e
topology: v5e:2x2
jax: 0.10.0
libtpu: 0.0.40
codegen_flags: <defaults>
</compile_context>

<pallas_src>
import jax
import jax.numpy as jnp
from jax.experimental import pallas as pl
from jax.experimental.pallas import tpu as pltpu


def _shape_consistency_kernel(x_ref, t_ref, out_ref):
    tb, H, W = x_ref.shape

    # Difference image in f32 (Sobel is linear & bias-free).
    d = x_ref[...].astype(jnp.float32) - t_ref[...].astype(jnp.float32)

    # Zero-pad 1 pixel on each spatial side (matches Conv2d(..., padding=1)).
    zr = jnp.zeros((tb, 1, W), jnp.float32)
    dp = jnp.concatenate([zr, d, zr], axis=1)                  # (tb, H+2, W)
    zc = jnp.zeros((tb, H + 2, 1), jnp.float32)
    dp = jnp.concatenate([zc, dp, zc], axis=2)                 # (tb, H+2, W+2)

    # Separable Sobel stencils (cross-correlation, PyTorch conv2d convention):
    #   sobel_x = [1,2,1]^T (vertical smooth)  (x)  [-1,0,1] (horizontal diff)
    #   sobel_y = [-1,0,1]^T (vertical diff)   (x)  [ 1,2,1] (horizontal smooth)
    hdiff = dp[:, :, 2:] - dp[:, :, :-2]                       # (tb, H+2, W)
    hsmooth = dp[:, :, :-2] + 2.0 * dp[:, :, 1:-1] + dp[:, :, 2:]

    edge_x = hdiff[:, 0:H, :] + 2.0 * hdiff[:, 1:H + 1, :] + hdiff[:, 2:H + 2, :]
    edge_y = hsmooth[:, 2:H + 2, :] - hsmooth[:, 0:H, :]

    partial = jnp.sum(edge_x * edge_x + edge_y * edge_y)       # scalar f32

    # Write the per-block partial into element (0,0) of an (8,128) f32 tile so
    # the grid axis stays "parallel"; the wrapper does the final cross-block sum.
    row = jax.lax.broadcasted_iota(jnp.int32, (8, 128), 0)
    col = jax.lax.broadcasted_iota(jnp.int32, (8, 128), 1)
    tile = jnp.where((row == 0) & (col == 0), partial, 0.0)
    out_ref[...] = tile.reshape(1, 8, 128)


def shape_consistency_loss(inp, tgt, *, vmem_workset_budget=28 * 1024 * 1024):
    """Pallas implementation of ShapeConsistencyLoss.forward for NCHW inputs (C == 1)."""
    assert inp.shape == tgt.shape
    B, C, H, W = inp.shape
    # The module's Conv2d(1, 1, ...) implies C == 1; fold channels into batch
    # (exactly equivalent for C == 1).
    Bt = B * C
    x = inp.reshape(Bt, H, W)
    t = tgt.reshape(Bt, H, W)
    n_elems = Bt * H * W  # mse 'mean' denominator for each term

    # Batch tile: largest block whose resident working set fits the budget
    # (2 inputs x 2 pipeline buffers in native dtype + ~8 f32 temporaries).
    itemsize = max(jnp.dtype(x.dtype).itemsize, jnp.dtype(t.dtype).itemsize)
    per_row = 2 * 2 * H * W * itemsize + 8 * (H + 2) * (W + 2) * 4
    block_b = max(1, min(Bt, vmem_workset_budget // per_row))
    if block_b >= 8:
        block_b = (block_b // 8) * 8
    num_blocks = pl.cdiv(Bt, block_b)
    b_pad = num_blocks * block_b
    if b_pad != Bt:
        # Zero rows give d == 0 -> zero edge response -> zero loss contribution.
        pad = b_pad - Bt
        x = jnp.concatenate([x, jnp.zeros((pad, H, W), x.dtype)], axis=0)
        t = jnp.concatenate([t, jnp.zeros((pad, H, W), t.dtype)], axis=0)
    # TODO(synk): add spatial (H/W) tiling with 1-pixel halos for images so large
    # that even a single row exceeds the VMEM budget.

    partials = pl.pallas_call(
        _shape_consistency_kernel,
        out_shape=jax.ShapeDtypeStruct((num_blocks, 8, 128), jnp.float32),
        grid_spec=pltpu.PrefetchScalarGridSpec(
            num_scalar_prefetch=0,
            grid=(num_blocks,),
            in_specs=[
                pl.BlockSpec((block_b, H, W), lambda i: (i, 0, 0)),
                pl.BlockSpec((block_b, H, W), lambda i: (i, 0, 0)),
            ],
            out_specs=pl.BlockSpec((1, 8, 128), lambda i: (i, 0, 0)),
        ),
        compiler_params=pltpu.CompilerParams(
            dimension_semantics=("parallel",),
            vmem_limit_bytes=48 * 1024 * 1024,
        ),
    )(x, t)

    return jnp.sum(partials) / jnp.float32(n_elems)


def _shape_consistency_ref(inp, tgt):
    """Pure-JAX reference matching the PyTorch module."""
    kx = jnp.array([[-1., 0., 1.], [-2., 0., 2.], [-1., 0., 1.]],
                   jnp.float32).reshape(1, 1, 3, 3)
    ky = jnp.array([[-1., -2., -1.], [0., 0., 0.], [1., 2., 1.]],
                   jnp.float32).reshape(1, 1, 3, 3)

    def conv(img, k):
        return jax.lax.conv_general_dilated(
            img.astype(jnp.float32), k, window_strides=(1, 1),
            padding=((1, 1), (1, 1)),
            dimension_numbers=("NCHW", "OIHW", "NCHW"),
            precision=jax.lax.Precision.HIGHEST)

    exi, eyi = conv(inp, kx), conv(inp, ky)
    ext, eyt = conv(tgt, kx), conv(tgt, ky)
    return jnp.mean((exi - ext) ** 2) + jnp.mean((eyi - eyt) ** 2)


if __name__ == "__main__":
    key = jax.random.PRNGKey(0)
    k1, k2 = jax.random.split(key)
    # Single-channel NCHW images, consistent with the module's Conv2d(1, 1, ...).
    inp = jax.random.normal(k1, (2, 1, 16, 16), dtype=jnp.float32)
    tgt = jax.random.normal(k2, (2, 1, 16, 16), dtype=jnp.float32)

    loss = shape_consistency_loss(inp, tgt)
    loss = jax.block_until_ready(loss)

    ref = _shape_consistency_ref(inp, tgt)
    assert jnp.allclose(loss, ref, rtol=1e-4, atol=1e-5), (loss, ref)

    print("KERNEL_OK")
</pallas_src>

<mosaic_0001>
module attributes {stable_mosaic.version = 11 : i64} {
  func.func @_shape_consistency_kernel(%arg0: i32, %arg1: memref<2x16x16xf32, #tpu.memory_space<vmem>>, %arg2: memref<2x16x16xf32, #tpu.memory_space<vmem>>, %arg3: memref<1x8x128xf32, #tpu.memory_space<vmem>>) attributes {dimension_semantics = [#tpu.dimension_semantics<parallel>], iteration_bounds = array<i64: 1>, scalar_prefetch = 0 : i64, scratch_operands = 0 : i64, tpu.core_type = #tpu.core_type<tc>, window_params = [{transform_indices = @transform_0, window_bounds = array<i64: 2, 16, 16>}, {transform_indices = @transform_1, window_bounds = array<i64: 2, 16, 16>}, {transform_indices = @transform_2, window_bounds = array<i64: 1, 8, 128>}]} {
    %c0 = arith.constant 0 : index
    %c0_0 = arith.constant 0 : index
    %c0_1 = arith.constant 0 : index
    %0 = vector.load %arg1[%c0, %c0_0, %c0_1] : memref<2x16x16xf32, #tpu.memory_space<vmem>>, vector<2x16x16xf32>
    %c0_2 = arith.constant 0 : index
    %c0_3 = arith.constant 0 : index
    %c0_4 = arith.constant 0 : index
    %1 = vector.load %arg2[%c0_2, %c0_3, %c0_4] : memref<2x16x16xf32, #tpu.memory_space<vmem>>, vector<2x16x16xf32>
    %2 = arith.subf %0, %1 : vector<2x16x16xf32>
    %cst = arith.constant 0.000000e+00 : f32
    %3 = vector.broadcast %cst : f32 to vector<2x1x16xf32>
    %4 = tpu.concatenate %3, %2, %3 in 1 : vector<2x1x16xf32>, vector<2x16x16xf32>, vector<2x1x16xf32> -> vector<2x18x16xf32>
    %cst_5 = arith.constant 0.000000e+00 : f32
    %5 = vector.broadcast %cst_5 : f32 to vector<2x18x1xf32>
    %6 = tpu.concatenate %5, %4, %5 in 2 : vector<2x18x1xf32>, vector<2x18x16xf32>, vector<2x18x1xf32> -> vector<2x18x18xf32>
    %7 = vector.extract_strided_slice %6 {offsets = [0, 0, 2], sizes = [2, 18, 16], strides = [1, 1, 1]} : vector<2x18x18xf32> to vector<2x18x16xf32>
    %8 = vector.extract_strided_slice %6 {offsets = [0, 0, 0], sizes = [2, 18, 16], strides = [1, 1, 1]} : vector<2x18x18xf32> to vector<2x18x16xf32>
    %9 = arith.subf %7, %8 : vector<2x18x16xf32>
    %10 = vector.extract_strided_slice %6 {offsets = [0, 0, 0], sizes = [2, 18, 16], strides = [1, 1, 1]} : vector<2x18x18xf32> to vector<2x18x16xf32>
    %11 = vector.extract_strided_slice %6 {offsets = [0, 0, 1], sizes = [2, 18, 16], strides = [1, 1, 1]} : vector<2x18x18xf32> to vector<2x18x16xf32>
    %cst_6 = arith.constant 2.000000e+00 : f32
    %12 = vector.broadcast %cst_6 : f32 to vector<2x18x16xf32>
    %13 = arith.mulf %12, %11 : vector<2x18x16xf32>
    %14 = arith.addf %10, %13 : vector<2x18x16xf32>
    %15 = vector.extract_strided_slice %6 {offsets = [0, 0, 2], sizes = [2, 18, 16], strides = [1, 1, 1]} : vector<2x18x18xf32> to vector<2x18x16xf32>
    %16 = arith.addf %14, %15 : vector<2x18x16xf32>
    %17 = vector.extract_strided_slice %9 {offsets = [0, 0, 0], sizes = [2, 16, 16], strides = [1, 1, 1]} : vector<2x18x16xf32> to vector<2x16x16xf32>
    %18 = vector.extract_strided_slice %9 {offsets = [0, 1, 0], sizes = [2, 16, 16], strides = [1, 1, 1]} : vector<2x18x16xf32> to vector<2x16x16xf32>
    %cst_7 = arith.constant 2.000000e+00 : f32
    %19 = vector.broadcast %cst_7 : f32 to vector<2x16x16xf32>
    %20 = arith.mulf %19, %18 : vector<2x16x16xf32>
    %21 = arith.addf %17, %20 : vector<2x16x16xf32>
    %22 = vector.extract_strided_slice %9 {offsets = [0, 2, 0], sizes = [2, 16, 16], strides = [1, 1, 1]} : vector<2x18x16xf32> to vector<2x16x16xf32>
    %23 = arith.addf %21, %22 : vector<2x16x16xf32>
    %24 = vector.extract_strided_slice %16 {offsets = [0, 2, 0], sizes = [2, 16, 16], strides = [1, 1, 1]} : vector<2x18x16xf32> to vector<2x16x16xf32>
    %25 = vector.extract_strided_slice %16 {offsets = [0, 0, 0], sizes = [2, 16, 16], strides = [1, 1, 1]} : vector<2x18x16xf32> to vector<2x16x16xf32>
    %26 = arith.subf %24, %25 : vector<2x16x16xf32>
    %27 = arith.mulf %23, %23 : vector<2x16x16xf32>
    %28 = arith.mulf %26, %26 : vector<2x16x16xf32>
    %29 = arith.addf %27, %28 : vector<2x16x16xf32>
    %30 = vector.shape_cast %29 : vector<2x16x16xf32> to vector<1x2x16x16xf32>
    %cst_8 = arith.constant dense<0.000000e+00> : vector<1xf32>
    %31 = vector.multi_reduction <add>, %30, %cst_8 [1, 2, 3] : vector<1x2x16x16xf32> to vector<1xf32>
    %32 = vector.shape_cast %31 : vector<1xf32> to vector<1x1x1x1xf32>
    %33 = vector.extract %32[0, 0, 0, 0] : f32 from vector<1x1x1x1xf32>
    %34 = tpu.iota {dimensions = array<i32: 0>} : vector<8x128xi32>
    %35 = tpu.iota {dimensions = array<i32: 1>} : vector<8x128xi32>
    %c0_i32 = arith.constant 0 : i32
    %36 = vector.broadcast %c0_i32 : i32 to vector<8x128xi32>
    %37 = arith.cmpi eq, %34, %36 : vector<8x128xi32>
    %c0_i32_9 = arith.constant 0 : i32
    %38 = vector.broadcast %c0_i32_9 : i32 to vector<8x128xi32>
    %39 = arith.cmpi eq, %35, %38 : vector<8x128xi32>
    %40 = arith.andi %37, %39 : vector<8x128xi1>
    %cst_10 = arith.constant 0.000000e+00 : f32
    %41 = vector.broadcast %33 : f32 to vector<8x128xf32>
    %42 = vector.broadcast %cst_10 : f32 to vector<8x128xf32>
    %43 = arith.select %40, %41, %42 : vector<8x128xi1>, vector<8x128xf32>
    %44 = vector.shape_cast %43 : vector<8x128xf32> to vector<1x8x128xf32>
    %c0_11 = arith.constant 0 : index
    %c0_12 = arith.constant 0 : index
    %c0_13 = arith.constant 0 : index
    %45 = vector.load %arg3[%c0_11, %c0_12, %c0_13] : memref<1x8x128xf32, #tpu.memory_space<vmem>>, vector<1x8x128xf32>
    tpu.vector_store %arg3[%c0_11, %c0_12, %c0_13], %44 {strides = array<i32>} : memref<1x8x128xf32, #tpu.memory_space<vmem>>, vector<1x8x128xf32>,
    return
  }
  func.func @transform_0(%arg0: i32) -> (i32, i32, i32) {
    %c0_i32 = arith.constant 0 : i32
    %c0_i32_0 = arith.constant 0 : i32
    %c0_i32_1 = arith.constant 0 : i32
    return %arg0, %c0_i32, %c0_i32_0 : i32, i32, i32
  }
  func.func @transform_1(%arg0: i32) -> (i32, i32, i32) {
    %c0_i32 = arith.constant 0 : i32
    %c0_i32_0 = arith.constant 0 : i32
    %c0_i32_1 = arith.constant 0 : i32
    return %arg0, %c0_i32, %c0_i32_0 : i32, i32, i32
  }
  func.func @transform_2(%arg0: i32) -> (i32, i32, i32) {
    %c0_i32 = arith.constant 0 : i32
    %c0_i32_0 = arith.constant 0 : i32
    %c0_i32_1 = arith.constant 0 : i32
    return %arg0, %c0_i32, %c0_i32_0 : i32, i32, i32
  }
}

</mosaic_0001>

<llo_original>
// kernel: tpu_custom_call.1
$region0: #{tpu_custom_call.1}
  #allocation0 [shape = 'u32[]', space=smem, size = 0x4, offset = 0x4, fixed_abs, tag = 'smem constant byte address 0x4 - core index']
  #allocation1 [shape = 'u32[72,128]{1,0:T(1,128)}', space=vmem, size = 0x9000, scoped, tag = 'internal scratch']
  %s0 = inlined_call_operand.hbm [shape: f32[2,16,16], index: 0, kind: input, shape index: {}]
  %s1 = inlined_call_operand.hbm [shape: f32[2,16,16], index: 1, kind: input, shape index: {}]
  %s2 = inlined_call_operand.hbm [shape: f32[1,8,128], index: 2, kind: output, shape index: {}]
  %s3 = sld [smem:[#allocation0]]
  $region26: #{tpu_custom_call.1} parent=0
    _
  %s5 = ssub.s32 1, %s3
  %s6 = scalar_select 0, %s5, %s3
  $region1: #{tpu_custom_call.1} parent=0
    #allocation2 [shape = 'u8[16384]{0}', space=vmem, size = 0x4000, scoped, tag = 'input window, operand 0, single buffered']
    #allocation3 [shape = 's32[1]{0}', space=sflag, size = 0x4, scoped, tag = 'scoped memory for tpu_custom_call.1']
    #allocation4 [shape = 's32[1]{0}', space=sflag, size = 0x4, scoped, tag = 'scoped memory for tpu_custom_call.1']
    #allocation5 [shape = 'u8[16384]{0}', space=vmem, size = 0x4000, scoped, tag = 'input window, operand 1, single buffered']
    #allocation6 [shape = 's32[1]{0}', space=sflag, size = 0x4, scoped, tag = 'scoped memory for tpu_custom_call.1']
    #allocation7 [shape = 'u8[4096]{0}', space=vmem, size = 0x1000, scoped, tag = 'output window, operand 0, single buffered']
    %7 = vsyncpa [#allocation3], 0
    %8 = vsyncpa [#allocation6], 0
    %9 = vsyncpa [#allocation4], 0
    // Predicated region
    $region2: #{tpu_custom_call.1} parent=1 // pred_check
      _
    $region3: #{tpu_custom_call.1} parent=1 // pred_check_branch
      %11 = sbr.rel (0) target = $region5
    $region4: #{tpu_custom_call.1} parent=1 // pred_region
      %13 = vsyncadd [#allocation3], 0
      %s14 = sshll.u32 %s0, 4
      %s15 = int_to_ptr.hbm [resolvable:$true] %s14
      %s16 = sshll.u32 [#allocation2], 4
      %s17 = int_to_ptr.vmem [resolvable:$true] %s16
      %22 = dma.hbm_to_vmem [thread:$0]  %s15, 512, %s17, [#allocation3], 128, 128, 8
    $region5: #{tpu_custom_call.1} parent=1 // pred_fallthru
      _
    // Predicated region
    $region6: #{tpu_custom_call.1} parent=1 // pred_check
      _
    $region7: #{tpu_custom_call.1} parent=1 // pred_check_branch
      %24 = sbr.rel (0) target = $region9
    $region8: #{tpu_custom_call.1} parent=1 // pred_region
      %26 = vsyncadd [#allocation6], 0
      %s27 = sshll.u32 %s1, 4
      %s28 = int_to_ptr.hbm [resolvable:$true] %s27
      %s29 = sshll.u32 [#allocation5], 4
      %s30 = int_to_ptr.vmem [resolvable:$true] %s29
      %35 = dma.hbm_to_vmem [thread:$0]  %s28, 512, %s30, [#allocation6], 128, 128, 8
    $region9: #{tpu_custom_call.1} parent=1 // pred_fallthru
      _
    // Predicated region
    $region10: #{tpu_custom_call.1} parent=1 // pred_check
      _
    $region11: #{tpu_custom_call.1} parent=1 // pred_check_branch
      %37 = sbr.rel (0) target = $region13
    $region12: #{tpu_custom_call.1} parent=1 // pred_region
      %39 = dma.done [#allocation3], 512
    $region13: #{tpu_custom_call.1} parent=1 // pred_fallthru
      _
    // Predicated region
    $region14: #{tpu_custom_call.1} parent=1 // pred_check
      _
    $region15: #{tpu_custom_call.1} parent=1 // pred_check_branch
      %41 = sbr.rel (0) target = $region17
    $region16: #{tpu_custom_call.1} parent=1 // pred_region
      %43 = dma.done [#allocation6], 512
    $region17: #{tpu_custom_call.1} parent=1 // pred_fallthru
      _
    %v44 = vld [vmem:[#allocation2] sm:$0xff]
    %v45 = vld [vmem:[#allocation2 + $0x8] sm:$0xff]
    %v46 = vld [vmem:[#allocation2 + $0x10] sm:$0xff]
    %v47 = vld [vmem:[#allocation2 + $0x18] sm:$0xff]
    %v48 = vld [vmem:[#allocation5] sm:$0xff]
    %v49 = vld [vmem:[#allocation5 + $0x8] sm:$0xff]
    %v50 = vld [vmem:[#allocation5 + $0x10] sm:$0xff]
    %v51 = vld [vmem:[#allocation5 + $0x18] sm:$0xff]
    %v52 = vsub.f32 %v44, %v48
    %v53 = vsub.f32 %v45, %v49
    %v54 = vsub.f32 %v46, %v50
    %v55 = vsub.f32 %v47, %v51
    %vm60 = vcmask 1040384
    %v61 = vrot.slane %v52, 7
    %v62 = vrot.slane %v53, 7
    %v63 = vsel %vm60, %v61, %v62
    %v64 = vrot.slane %v54, 7
    %v65 = vrot.slane %v55, 7
    %v66 = vsel %vm60, %v64, %v65
    %v71 = vsel %vm60, 0.0, %v61
    %v72 = vsel %vm60, 0.0, %v64
    %v73 = vsel %vm60, %v62, 0.0
    %v74 = vsel %vm60, %v65, 0.0
    %79 = vrot.lane.b32.xlu0 %v71, 1
    %v80 = vpop.permute.xlu0 %79
    %81 = vrot.lane.b32.xlu0 %v63, 1
    %v82 = vpop.permute.xlu0 %81
    %83 = vrot.lane.b32.xlu0 %v73, 1
    %v84 = vpop.permute.xlu0 %83
    %85 = vrot.lane.b32.xlu0 %v72, 1
    %v86 = vpop.permute.xlu0 %85
    %87 = vrot.lane.b32.xlu0 %v66, 1
    %v88 = vpop.permute.xlu0 %87
    %89 = vrot.lane.b32.xlu0 %v74, 1
    %v90 = vpop.permute.xlu0 %89
    %vm97 = vcmask 7168
    %v98 = vsel %vm97, 0.0, %v80
    %v99 = vsel %vm97, 0.0, %v82
    %v100 = vsel %vm97, 0.0, %v84
    %v101 = vsel %vm97, 0.0, %v86
    %v102 = vsel %vm97, 0.0, %v88
    %v103 = vsel %vm97, 0.0, %v90
    %vm104 = vcmask 138240
    %v105 = vsel %vm104, %v98, 0.0
    %v106 = vsel %vm104, %v99, 0.0
    %v107 = vsel %vm104, %v100, 0.0
    %v108 = vsel %vm104, %v101, 0.0
    %v109 = vsel %vm104, %v102, 0.0
    %v110 = vsel %vm104, %v103, 0.0
    %117 = vrot.lane.b32.xlu0 %v105, 2
    %v118 = vpop.permute.xlu0 %117
    %119 = vrot.lane.b32.xlu0 %v106, 2
    %v120 = vpop.permute.xlu0 %119
    %121 = vrot.lane.b32.xlu0 %v107, 2
    %v122 = vpop.permute.xlu0 %121
    %123 = vrot.lane.b32.xlu0 %v108, 2
    %v124 = vpop.permute.xlu0 %123
    %125 = vrot.lane.b32.xlu0 %v109, 2
    %v126 = vpop.permute.xlu0 %125
    %127 = vrot.lane.b32.xlu0 %v110, 2
    %v128 = vpop.permute.xlu0 %127
    %v135 = vsub.f32 %v105, %v118
    %v136 = vsub.f32 %v106, %v120
    %v137 = vsub.f32 %v107, %v122
    %v138 = vsub.f32 %v108, %v124
    %v139 = vsub.f32 %v109, %v126
    %v140 = vsub.f32 %v110, %v128
    %v141 = vmul.f32 %v105, 2.0
    %v142 = vmul.f32 %v106, 2.0
    %v143 = vmul.f32 %v107, 2.0
    %v144 = vmul.f32 %v108, 2.0
    %v145 = vmul.f32 %v109, 2.0
    %v146 = vmul.f32 %v110, 2.0
    %153 = vrot.lane.b32.xlu0 %v141, 127
    %v154 = vpop.permute.xlu0 %153
    %155 = vrot.lane.b32.xlu0 %v142, 127
    %v156 = vpop.permute.xlu0 %155
    %157 = vrot.lane.b32.xlu0 %v143, 127
    %v158 = vpop.permute.xlu0 %157
    %159 = vrot.lane.b32.xlu0 %v144, 127
    %v160 = vpop.permute.xlu0 %159
    %161 = vrot.lane.b32.xlu0 %v145, 127
    %v162 = vpop.permute.xlu0 %161
    %163 = vrot.lane.b32.xlu0 %v146, 127
    %v164 = vpop.permute.xlu0 %163
    %v171 = vadd.f32 %v105, %v154
    %v172 = vadd.f32 %v106, %v156
    %v173 = vadd.f32 %v107, %v158
    %v174 = vadd.f32 %v108, %v160
    %v175 = vadd.f32 %v109, %v162
    %v176 = vadd.f32 %v110, %v164
    %177 = vrot.lane.b32.xlu0 %v105, 126
    %v178 = vpop.permute.xlu0 %177
    %179 = vrot.lane.b32.xlu0 %v106, 126
    %v180 = vpop.permute.xlu0 %179
    %181 = vrot.lane.b32.xlu0 %v107, 126
    %v182 = vpop.permute.xlu0 %181
    %183 = vrot.lane.b32.xlu0 %v108, 126
    %v184 = vpop.permute.xlu0 %183
    %185 = vrot.lane.b32.xlu0 %v109, 126
    %v186 = vpop.permute.xlu0 %185
    %187 = vrot.lane.b32.xlu0 %v110, 126
    %v188 = vpop.permute.xlu0 %187
    %v195 = vadd.f32 %v171, %v178
    %v196 = vadd.f32 %v172, %v180
    %v197 = vadd.f32 %v173, %v182
    %v198 = vadd.f32 %v174, %v184
    %v199 = vadd.f32 %v175, %v186
    %v200 = vadd.f32 %v176, %v188
    %v201 = vmul.f32 %v135, 2.0
    %v202 = vmul.f32 %v136, 2.0
    %v203 = vmul.f32 %v137, 2.0
    %v204 = vmul.f32 %v138, 2.0
    %v205 = vmul.f32 %v139, 2.0
    %v206 = vmul.f32 %v140, 2.0
    %vm213 = vcmask 1046528
    %v214 = vrot.slane %v201, 1
    %v215 = vrot.slane %v202, 1
    %v216 = vsel %vm213, %v214, %v215
    %v217 = vrot.slane %v203, 1
    %v218 = vsel %vm213, %v215, %v217
    %v219 = vrot.slane %v204, 1
    %v220 = vrot.slane %v205, 1
    %v221 = vsel %vm213, %v219, %v220
    %v222 = vrot.slane %v206, 1
    %v223 = vsel %vm213, %v220, %v222
    %v228 = vadd.f32 %v135, %v216
    %v229 = vadd.f32 %v136, %v218
    %v230 = vadd.f32 %v138, %v221
    %v231 = vadd.f32 %v139, %v223
    %vm238 = vcmask 1045504
    %v239 = vrot.slane %v135, 2
    %v240 = vrot.slane %v136, 2
    %v241 = vsel %vm238, %v239, %v240
    %v242 = vrot.slane %v137, 2
    %v243 = vsel %vm238, %v240, %v242
    %v244 = vrot.slane %v138, 2
    %v245 = vrot.slane %v139, 2
    %v246 = vsel %vm238, %v244, %v245
    %v247 = vrot.slane %v140, 2
    %v248 = vsel %vm238, %v245, %v247
    %v253 = vadd.f32 %v228, %v241
    %v254 = vadd.f32 %v229, %v243
    %v255 = vadd.f32 %v230, %v246
    %v256 = vadd.f32 %v231, %v248
    %vm261 = vcmask 1041408
    %v262 = vrot.slane %v195, 6
    %v263 = vrot.slane %v196, 6
    %v264 = vsel %vm261, %v262, %v263
    %v265 = vrot.slane %v198, 6
    %v266 = vrot.slane %v199, 6
    %v267 = vsel %vm261, %v265, %v266
    %v274 = vsub.f32 %v195, %v262
    %v275 = vsub.f32 %v196, %v264
    %v276 = vsub.f32 %v197, %v263
    %v277 = vsub.f32 %v198, %v265
    %v278 = vsub.f32 %v199, %v267
    %v279 = vsub.f32 %v200, %v266
    %v280 = vmul.f32 %v253, %v253
    %v281 = vmul.f32 %v254, %v254
    %v282 = vmul.f32 %v255, %v255
    %v283 = vmul.f32 %v256, %v256
    %v284 = vmul.f32 %v274, %v274
    %v285 = vmul.f32 %v275, %v275
    %v286 = vmul.f32 %v276, %v276
    %v287 = vmul.f32 %v277, %v277
    %v288 = vmul.f32 %v278, %v278
    %v289 = vmul.f32 %v279, %v279
    %v296 = vrot.slane %v284, 2
    %v297 = vrot.slane %v285, 2
    %v298 = vsel %vm238, %v296, %v297
    %v299 = vrot.slane %v286, 2
    %v300 = vsel %vm238, %v297, %v299
    %v301 = vrot.slane %v287, 2
    %v302 = vrot.slane %v288, 2
    %v303 = vsel %vm238, %v301, %v302
    %v304 = vrot.slane %v289, 2
    %v305 = vsel %vm238, %v302, %v304
    %306 = vrot.lane.b32.xlu0 %v298, 2
    %v307 = vpop.permute.xlu0 %306
    %308 = vrot.lane.b32.xlu0 %v300, 2
    %v309 = vpop.permute.xlu0 %308
    %310 = vrot.lane.b32.xlu0 %v303, 2
    %v311 = vpop.permute.xlu0 %310
    %312 = vrot.lane.b32.xlu0 %v305, 2
    %v313 = vpop.permute.xlu0 %312
    %v318 = vadd.f32 %v280, %v307
    %v319 = vadd.f32 %v281, %v309
    %v320 = vadd.f32 %v282, %v311
    %v321 = vadd.f32 %v283, %v313
    %326 = vrot.lane.b32.xlu0 %v318, 126
    %v327 = vpop.permute.xlu0 %326
    %328 = vrot.lane.b32.xlu0 %v319, 126
    %v329 = vpop.permute.xlu0 %328
    %330 = vrot.lane.b32.xlu0 %v320, 126
    %v331 = vpop.permute.xlu0 %330
    %332 = vrot.lane.b32.xlu0 %v321, 126
    %v333 = vpop.permute.xlu0 %332
    %vm338 = vcmask 130048
    %v339 = vsel %vm338, %v327, 0.0
    %v340 = vsel %vm338, %v329, 0.0
    %v341 = vadd.f32 %v339, %v340
    %v342 = vsel %vm338, %v331, 0.0
    %v343 = vadd.f32 %v341, %v342
    %v344 = vsel %vm338, %v333, 0.0
    %v345 = vadd.f32 %v343, %v344
    %346 = vadd.xlane.f32.xlu0 %v345
    %v347 = vpop.xlane.xlu0 %346
    %v348 = vrot.slane %v347, 4
    %v349 = vadd.f32 %v347, %v348
    %v350 = vrot.slane %v349, 2
    %v351 = vadd.f32 %v349, %v350
    %v352 = vrot.slane %v351, 1
    %v353 = vadd.f32 %v351, %v352
    %s354 = vtos %v353
    %v355 = vlaneseq
    %v356 = vshrl.u32 %v355, 7
    %v357 = vlaneseq
    %v358 = vand.u32 %v357, 127
    %vm359 = vcmp.eq.s32.totalorder %v356, 0
    %vm360 = vcmp.eq.s32.totalorder %v358, 0
    %vm361 = vmand %vm359, %vm360
    %v362 = vstv %s354
    %v363 = vsel %vm361, %v362, 0.0
    %364 = vst [vmem:[#allocation7] sm:$0xff] %v363
    // Predicated region
    $region18: #{tpu_custom_call.1} parent=1 // pred_check
      _
    $region19: #{tpu_custom_call.1} parent=1 // pred_check_branch
      %366 = sbr.rel (0) target = $region21
    $region20: #{tpu_custom_call.1} parent=1 // pred_region
      %368 = vsyncadd [#allocation4], 0
      %s370 = sshll.u32 [#allocation7], 4
      %s371 = int_to_ptr.vmem [resolvable:$true] %s370
      %s372 = sshll.u32 %s2, 4
      %s373 = int_to_ptr.hbm [resolvable:$true] %s372
      %375 = dma.vmem_to_hbm [thread:$0]  %s371, 128, %s373, [#allocation4]
    $region21: #{tpu_custom_call.1} parent=1 // pred_fallthru
      _
    // Predicated region
    $region22: #{tpu_custom_call.1} parent=1 // pred_check
      _
    $region23: #{tpu_custom_call.1} parent=1 // pred_check_branch
      %377 = sbr.rel (0) target = $region25
    $region24: #{tpu_custom_call.1} parent=1 // pred_region
      %379 = dma.done [#allocation4], 128
    $region25: #{tpu_custom_call.1} parent=1 // pred_fallthru
      _
    %380 = vsyncpa [#allocation3], 1
    %381 = vsyncpa [#allocation6], 1
    %382 = vsyncpa [#allocation4], 1

</llo_original>
